<compile_context>
chip_gen: v7x
topology: tpu7x:2x2x1
jax: 0.10.0
libtpu: 0.0.40
codegen_flags: <defaults>
</compile_context>

<pallas_src>
import functools

import jax
import jax.numpy as jnp
from jax.experimental import pallas as pl
from jax.experimental.pallas import tpu as pltpu


def _round_up(a, b):
    return (a + b - 1) // b * b


def _vmem_limit_bytes():
    # Leave headroom below physical VMEM (v7x: 64 MiB -> ~48 MiB usable;
    # v5e/v6e: 128 MiB -> ~100 MiB usable).
    try:
        cap = int(getattr(pltpu.get_tpu_info(), "vmem_capacity_bytes"))
    except Exception:
        cap = 128 << 20
    return max(32 << 20, min(cap - (16 << 20), 100 << 20))


def _conv_stats_kernel(lhs_ref, rhs_ref, y_ref, sum_ref, ssq_ref, acc_ref):
    k = pl.program_id(2)

    @pl.when(k == 0)
    def _():
        acc_ref[...] = jnp.zeros_like(acc_ref)

    acc_ref[...] += jnp.dot(lhs_ref[...], rhs_ref[...],
                            preferred_element_type=jnp.float32)

    @pl.when(k == pl.num_programs(2) - 1)
    def _():
        acc = acc_ref[...]
        y_ref[...] = acc.astype(y_ref.dtype)
        sum_ref[...] = jnp.sum(acc, axis=0, keepdims=True)
        ssq_ref[...] = jnp.sum(acc * acc, axis=0, keepdims=True)


def _bn_relu6_kernel(y_ref, scale_ref, shift_ref, o_ref):
    y = y_ref[...].astype(jnp.float32)
    o_ref[...] = jnp.clip(y * scale_ref[...] + shift_ref[...],
                          0.0, 6.0).astype(o_ref.dtype)


@functools.partial(jax.jit, static_argnames=("stride",))
def conv_block(x_nchw, weight, gamma, beta, *, stride):
    """ConvBlock forward: conv3x3(pad=1, no bias) -> BatchNorm2d (batch stats) -> ReLU6."""
    N, Cin, H, W = x_nchw.shape
    Cout = weight.shape[0]
    KH = KW = 3
    pad = 1
    Hout = (H + 2 * pad - KH) // stride + 1
    Wout = (W + 2 * pad - KW) // stride + 1
    M = N * Hout * Wout
    K = KH * KW * Cin

    Kp = _round_up(K, 128)            # lane-dense contraction dim
    Cp = _round_up(Cout, 128)         # lane-dense output channels

    TN = 256 if Cp % 256 == 0 else 128            # v6e/v7x MXU is 2x256x256
    TK = 512 if Kp % 512 == 0 else (256 if Kp % 256 == 0 else 128)
    TM = 512 if M >= 512 else _round_up(M, 8)
    Mp = _round_up(M, TM)
    num_m, num_n, num_k = Mp // TM, Cp // TN, Kp // TK

    # ---- XLA prologue: NHWC + spatial pad + im2col + K/M pad + bf16 cast ----
    # TODO(synk): for stride-1 / large-Cin layers, build the folded-K LHS tile
    #             inside the kernel from 9 shifted reads of a haloed NHWC block
    #             to avoid the ~9x HBM read inflation of materialized im2col.
    x = jnp.transpose(x_nchw, (0, 2, 3, 1))                       # NHWC
    xp = jnp.pad(x, ((0, 0), (pad, pad), (pad, pad), (0, 0)))
    taps = []
    for kh in range(KH):
        for kw in range(KW):
            taps.append(jax.lax.slice(
                xp,
                (0, kh, kw, 0),
                (N, kh + (Hout - 1) * stride + 1,
                 kw + (Wout - 1) * stride + 1, Cin),
                (1, stride, stride, 1)))
    patches = jnp.concatenate(taps, axis=-1).reshape(M, K)        # [M, 9*Cin]
    lhs = jnp.pad(patches, ((0, Mp - M), (0, Kp - K))).astype(jnp.bfloat16)

    # weight [Cout, Cin, 3, 3] -> [3, 3, Cin, Cout] -> [Kp, Cp] (matches tap order)
    w = jnp.transpose(weight, (2, 3, 1, 0)).reshape(K, Cout)
    rhs = jnp.pad(w, ((0, Kp - K), (0, Cp - Cout))).astype(jnp.bfloat16)

    vmem_limit = _vmem_limit_bytes()
    conv_flops = 2 * Mp * Kp * Cp

    # ---- pass 1: tiled conv matmul + per-tile channel sum / sum-of-squares ----
    # TODO(synk): single-buffer the rhs block (pl.Buffered(1)) when it is grid-
    #             invariant to reclaim VMEM on v7x for 512->512 layers.
    conv_bf16, sums, ssqs = pl.pallas_call(
        _conv_stats_kernel,
        grid_spec=pltpu.PrefetchScalarGridSpec(
            num_scalar_prefetch=0,
            grid=(num_m, num_n, num_k),
            in_specs=[
                pl.BlockSpec((TM, TK), lambda i, j, k: (i, k)),
                pl.BlockSpec((TK, TN), lambda i, j, k: (k, j)),
            ],
            out_specs=(
                pl.BlockSpec((TM, TN), lambda i, j, k: (i, j)),
                pl.BlockSpec((1, TN), lambda i, j, k: (i, j)),
                pl.BlockSpec((1, TN), lambda i, j, k: (i, j)),
            ),
            scratch_shapes=[pltpu.VMEM((TM, TN), jnp.float32)],
        ),
        out_shape=(
            jax.ShapeDtypeStruct((Mp, Cp), jnp.bfloat16),
            jax.ShapeDtypeStruct((num_m, Cp), jnp.float32),
            jax.ShapeDtypeStruct((num_m, Cp), jnp.float32),
        ),
        compiler_params=pltpu.CompilerParams(
            dimension_semantics=("parallel", "parallel", "arbitrary"),
            vmem_limit_bytes=vmem_limit),
        cost_estimate=pl.CostEstimate(
            flops=conv_flops, transcendentals=0,
            bytes_accessed=int(Mp * Kp * 2 * num_n + Kp * Cp * 2 * num_m
                               + Mp * Cp * 2 + 2 * num_m * Cp * 4)),
    )(lhs, rhs)

    # ---- tiny XLA fold: global batch stats -> per-channel scale / shift ----
    # Padded rows / channels of the conv output are exactly zero, so dividing
    # the padded-row-inclusive sums by the true M keeps mean/var exact.
    mean = jnp.sum(sums, axis=0) / M
    var = jnp.maximum(jnp.sum(ssqs, axis=0) / M - mean * mean, 0.0)
    # TODO(synk): switch to a centered / Welford-style second stats pass if the
    #             E[x^2]-E[x]^2 f32 fold ever cancels badly for deep nets.
    gamma_p = jnp.pad(gamma.astype(jnp.float32), (0, Cp - Cout))
    beta_p = jnp.pad(beta.astype(jnp.float32), (0, Cp - Cout))
    scale_v = gamma_p * jax.lax.rsqrt(var + 1e-5)
    shift_v = beta_p - mean * scale_v
    scale = scale_v.reshape(1, Cp)
    shift = shift_v.reshape(1, Cp)

    # ---- pass 2: elementwise BN affine + ReLU6 over the cached bf16 conv ----
    out = pl.pallas_call(
        _bn_relu6_kernel,
        grid_spec=pltpu.PrefetchScalarGridSpec(
            num_scalar_prefetch=0,
            grid=(num_m, num_n),
            in_specs=[
                pl.BlockSpec((TM, TN), lambda i, j: (i, j)),
                pl.BlockSpec((1, TN), lambda i, j: (0, j)),
                pl.BlockSpec((1, TN), lambda i, j: (0, j)),
            ],
            out_specs=pl.BlockSpec((TM, TN), lambda i, j: (i, j)),
        ),
        out_shape=jax.ShapeDtypeStruct((Mp, Cp), jnp.bfloat16),
        compiler_params=pltpu.CompilerParams(
            dimension_semantics=("parallel", "parallel"),
            vmem_limit_bytes=vmem_limit),
        cost_estimate=pl.CostEstimate(
            flops=3 * Mp * Cp, transcendentals=0,
            bytes_accessed=int(2 * Mp * Cp * 2 + 2 * Cp * 4)),
    )(conv_bf16, scale, shift)

    # ---- epilogue: drop padding, back to NCHW f32 (module contract) ----
    # TODO(synk): fused downstream consumers should take the bf16 NHWC /
    #             Cp-padded tensor directly and skip this slice + transpose.
    out = out[:M, :Cout].reshape(N, Hout, Wout, Cout)
    return jnp.transpose(out, (0, 3, 1, 2)).astype(jnp.float32)


if __name__ == "__main__":
    key = jax.random.PRNGKey(0)
    k_w, k_g, k_b, k_x = jax.random.split(key, 4)

    # small shapes consistent with the module (stem-like layer)
    N, Cin, H, W = 2, 4, 16, 16
    Cout, stride = 8, 2

    weight = 0.1 * jax.random.normal(k_w, (Cout, Cin, 3, 3), jnp.float32)
    gamma = 1.0 + 0.1 * jax.random.normal(k_g, (Cout,), jnp.float32)
    beta = 0.1 * jax.random.normal(k_b, (Cout,), jnp.float32)
    x = jax.random.normal(k_x, (N, Cin, H, W), jnp.float32)

    y = jax.block_until_ready(conv_block(x, weight, gamma, beta, stride=stride))

    # Reference A models the kernel's quantization (bf16 MXU operands, f32
    # accumulation/stats, bf16 cached conv, bf16 output); reference B is the
    # full-f32 module math (looser tolerance: pure bf16 rounding effects).
    def reference(quantized):
        xq = x.astype(jnp.bfloat16).astype(jnp.float32) if quantized else x
        wq = weight.astype(jnp.bfloat16).astype(jnp.float32) if quantized else weight
        conv = jax.lax.conv_general_dilated(
            xq, wq, window_strides=(stride, stride), padding=((1, 1), (1, 1)),
            dimension_numbers=("NCHW", "OIHW", "NCHW"),
            precision=jax.lax.Precision.HIGHEST)
        mean = jnp.mean(conv, axis=(0, 2, 3), keepdims=True)
        var = jnp.mean(jnp.square(conv - mean), axis=(0, 2, 3), keepdims=True)
        scale = gamma.reshape(1, -1, 1, 1) * jax.lax.rsqrt(var + 1e-5)
        shift = beta.reshape(1, -1, 1, 1) - mean * scale
        conv_c = conv.astype(jnp.bfloat16).astype(jnp.float32) if quantized else conv
        out = jnp.clip(conv_c * scale + shift, 0.0, 6.0)
        if quantized:
            out = out.astype(jnp.bfloat16).astype(jnp.float32)
        return out

    y_ref_q = reference(True)
    y_ref_f = reference(False)

    assert y.shape == y_ref_q.shape, (y.shape, y_ref_q.shape)
    err_q = float(jnp.max(jnp.abs(y - y_ref_q)))
    err_f = float(jnp.max(jnp.abs(y - y_ref_f)))
    # Tolerances allow 1-2 bf16 ulp divergence from the bf16 conv cache / output stores.
    assert err_q < 5e-2, f"max abs error vs quantized reference {err_q}"
    assert err_f < 1.5e-1, f"max abs error vs f32 reference {err_f}"

    print("KERNEL_OK")
</pallas_src>

<mosaic_0001>
module attributes {stable_mosaic.version = 11 : i64} {
  func.func @_conv_stats_kernel(%arg0: i32, %arg1: i32, %arg2: i32, %arg3: memref<128x128xbf16, #tpu.memory_space<vmem>>, %arg4: memref<128x128xbf16, #tpu.memory_space<vmem>>, %arg5: memref<128x128xbf16, #tpu.memory_space<vmem>>, %arg6: memref<1x128xf32, #tpu.memory_space<vmem>>, %arg7: memref<1x128xf32, #tpu.memory_space<vmem>>, %arg8: memref<128x128xf32, #tpu.memory_space<vmem>>) attributes {dimension_semantics = [#tpu.dimension_semantics<parallel>, #tpu.dimension_semantics<parallel>, #tpu.dimension_semantics<arbitrary>], iteration_bounds = array<i64: 1, 1, 1>, scalar_prefetch = 0 : i64, scratch_operands = 1 : i64, tpu.core_type = #tpu.core_type<tc>, window_params = [{transform_indices = @transform_0, window_bounds = array<i64: 128, 128>}, {transform_indices = @transform_1, window_bounds = array<i64: 128, 128>}, {transform_indices = @transform_2, window_bounds = array<i64: 128, 128>}, {transform_indices = @transform_3, window_bounds = array<i64: 1, 128>}, {transform_indices = @transform_4, window_bounds = array<i64: 1, 128>}]} {
    %c0_i32 = arith.constant 0 : i32
    %0 = arith.cmpi eq, %arg2, %c0_i32 : i32
    %1 = arith.extui %0 : i1 to i32
    %c0_i32_0 = arith.constant 0 : i32
    %2 = arith.cmpi ne, %1, %c0_i32_0 : i32
    scf.if %2 {
      %cst_10 = arith.constant 0.000000e+00 : f32
      %12 = vector.broadcast %cst_10 : f32 to vector<128x128xf32>
      %c0_11 = arith.constant 0 : index
      %c0_12 = arith.constant 0 : index
      %13 = vector.load %arg8[%c0_11, %c0_12] : memref<128x128xf32, #tpu.memory_space<vmem>>, vector<128x128xf32>
      tpu.vector_store %arg8[%c0_11, %c0_12], %12 {strides = array<i32>} : memref<128x128xf32, #tpu.memory_space<vmem>>, vector<128x128xf32>,
    } else {
    }
    %c0 = arith.constant 0 : index
    %c0_1 = arith.constant 0 : index
    %3 = vector.load %arg8[%c0, %c0_1] : memref<128x128xf32, #tpu.memory_space<vmem>>, vector<128x128xf32>
    %c0_2 = arith.constant 0 : index
    %c0_3 = arith.constant 0 : index
    %4 = vector.load %arg3[%c0_2, %c0_3] : memref<128x128xbf16, #tpu.memory_space<vmem>>, vector<128x128xbf16>
    %c0_4 = arith.constant 0 : index
    %c0_5 = arith.constant 0 : index
    %5 = vector.load %arg4[%c0_4, %c0_5] : memref<128x128xbf16, #tpu.memory_space<vmem>>, vector<128x128xbf16>
    %cst = arith.constant dense<0.000000e+00> : vector<128x128xf32>
    %6 = tpu.matmul %4, %5, %cst {dimension_numbers = #tpu.dot_dimension_numbers<[1], [0], [0], [1], [0, 0, 1, 1], [], []>} : vector<128x128xbf16>, vector<128x128xbf16>, vector<128x128xf32> -> vector<128x128xf32>
    %7 = arith.addf %3, %6 : vector<128x128xf32>
    %c0_6 = arith.constant 0 : index
    %c0_7 = arith.constant 0 : index
    %8 = vector.load %arg8[%c0_6, %c0_7] : memref<128x128xf32, #tpu.memory_space<vmem>>, vector<128x128xf32>
    tpu.vector_store %arg8[%c0_6, %c0_7], %7 {strides = array<i32>} : memref<128x128xf32, #tpu.memory_space<vmem>>, vector<128x128xf32>,
    %c0_i32_8 = arith.constant 0 : i32
    %9 = arith.cmpi eq, %arg2, %c0_i32_8 : i32
    %10 = arith.extui %9 : i1 to i32
    %c0_i32_9 = arith.constant 0 : i32
    %11 = arith.cmpi ne, %10, %c0_i32_9 : i32
    scf.if %11 {
      %c0_10 = arith.constant 0 : index
      %c0_11 = arith.constant 0 : index
      %12 = vector.load %arg8[%c0_10, %c0_11] : memref<128x128xf32, #tpu.memory_space<vmem>>, vector<128x128xf32>
      %13 = arith.truncf %12 : vector<128x128xf32> to vector<128x128xbf16>
      %c0_12 = arith.constant 0 : index
      %c0_13 = arith.constant 0 : index
      %14 = vector.load %arg5[%c0_12, %c0_13] : memref<128x128xbf16, #tpu.memory_space<vmem>>, vector<128x128xbf16>
      tpu.vector_store %arg5[%c0_12, %c0_13], %13 {strides = array<i32>} : memref<128x128xbf16, #tpu.memory_space<vmem>>, vector<128x128xbf16>,
      %cst_14 = arith.constant dense<0.000000e+00> : vector<128xf32>
      %15 = vector.multi_reduction <add>, %12, %cst_14 [0] : vector<128x128xf32> to vector<128xf32>
      %16 = vector.shape_cast %15 : vector<128xf32> to vector<1x128xf32>
      %c0_15 = arith.constant 0 : index
      %c0_16 = arith.constant 0 : index
      %17 = vector.load %arg6[%c0_15, %c0_16] : memref<1x128xf32, #tpu.memory_space<vmem>>, vector<1x128xf32>
      tpu.vector_store %arg6[%c0_15, %c0_16], %16 {strides = array<i32>} : memref<1x128xf32, #tpu.memory_space<vmem>>, vector<1x128xf32>,
      %18 = arith.mulf %12, %12 : vector<128x128xf32>
      %cst_17 = arith.constant dense<0.000000e+00> : vector<128xf32>
      %19 = vector.multi_reduction <add>, %18, %cst_17 [0] : vector<128x128xf32> to vector<128xf32>
      %20 = vector.shape_cast %19 : vector<128xf32> to vector<1x128xf32>
      %c0_18 = arith.constant 0 : index
      %c0_19 = arith.constant 0 : index
      %21 = vector.load %arg7[%c0_18, %c0_19] : memref<1x128xf32, #tpu.memory_space<vmem>>, vector<1x128xf32>
      tpu.vector_store %arg7[%c0_18, %c0_19], %20 {strides = array<i32>} : memref<1x128xf32, #tpu.memory_space<vmem>>, vector<1x128xf32>,
    } else {
    }
    return
  }
  func.func @transform_0(%arg0: i32, %arg1: i32, %arg2: i32) -> (i32, i32) {
    %c0_i32 = arith.constant 0 : i32
    return %arg0, %arg2 : i32, i32
  }
  func.func @transform_1(%arg0: i32, %arg1: i32, %arg2: i32) -> (i32, i32) {
    %c0_i32 = arith.constant 0 : i32
    return %arg2, %arg1 : i32, i32
  }
  func.func @transform_2(%arg0: i32, %arg1: i32, %arg2: i32) -> (i32, i32) {
    %c0_i32 = arith.constant 0 : i32
    return %arg0, %arg1 : i32, i32
  }
  func.func @transform_3(%arg0: i32, %arg1: i32, %arg2: i32) -> (i32, i32) {
    %c0_i32 = arith.constant 0 : i32
    return %arg0, %arg1 : i32, i32
  }
  func.func @transform_4(%arg0: i32, %arg1: i32, %arg2: i32) -> (i32, i32) {
    %c0_i32 = arith.constant 0 : i32
    return %arg0, %arg1 : i32, i32
  }
}

module attributes {stable_mosaic.version = 11 : i64} {
  func.func @_bn_relu6_kernel(%arg0: i32, %arg1: i32, %arg2: memref<128x128xbf16, #tpu.memory_space<vmem>>, %arg3: memref<1x128xf32, #tpu.memory_space<vmem>>, %arg4: memref<1x128xf32, #tpu.memory_space<vmem>>, %arg5: memref<128x128xbf16, #tpu.memory_space<vmem>>) attributes {dimension_semantics = [#tpu.dimension_semantics<parallel>, #tpu.dimension_semantics<parallel>], iteration_bounds = array<i64: 1, 1>, scalar_prefetch = 0 : i64, scratch_operands = 0 : i64, tpu.core_type = #tpu.core_type<tc>, window_params = [{transform_indices = @transform_0, window_bounds = array<i64: 128, 128>}, {transform_indices = @transform_1, window_bounds = array<i64: 1, 128>}, {transform_indices = @transform_2, window_bounds = array<i64: 1, 128>}, {transform_indices = @transform_3, window_bounds = array<i64: 128, 128>}]} {
    %c0 = arith.constant 0 : index
    %c0_0 = arith.constant 0 : index
    %0 = vector.load %arg2[%c0, %c0_0] : memref<128x128xbf16, #tpu.memory_space<vmem>>, vector<128x128xbf16>
    %1 = arith.extf %0 : vector<128x128xbf16> to vector<128x128xf32>
    %c0_1 = arith.constant 0 : index
    %c0_2 = arith.constant 0 : index
    %2 = vector.load %arg3[%c0_1, %c0_2] : memref<1x128xf32, #tpu.memory_space<vmem>>, vector<1x128xf32>
    %3 = vector.broadcast %2 : vector<1x128xf32> to vector<128x128xf32>
    %4 = arith.mulf %1, %3 : vector<128x128xf32>
    %c0_3 = arith.constant 0 : index
    %c0_4 = arith.constant 0 : index
    %5 = vector.load %arg4[%c0_3, %c0_4] : memref<1x128xf32, #tpu.memory_space<vmem>>, vector<1x128xf32>
    %6 = vector.broadcast %5 : vector<1x128xf32> to vector<128x128xf32>
    %7 = arith.addf %4, %6 : vector<128x128xf32>
    %cst = arith.constant 0.000000e+00 : f32
    %cst_5 = arith.constant 6.000000e+00 : f32
    %8 = vector.broadcast %cst : f32 to vector<128x128xf32>
    %9 = arith.maximumf %8, %7 : vector<128x128xf32>
    %10 = vector.broadcast %cst_5 : f32 to vector<128x128xf32>
    %11 = arith.minimumf %10, %9 : vector<128x128xf32>
    %12 = arith.truncf %11 : vector<128x128xf32> to vector<128x128xbf16>
    %c0_6 = arith.constant 0 : index
    %c0_7 = arith.constant 0 : index
    %13 = vector.load %arg5[%c0_6, %c0_7] : memref<128x128xbf16, #tpu.memory_space<vmem>>, vector<128x128xbf16>
    tpu.vector_store %arg5[%c0_6, %c0_7], %12 {strides = array<i32>} : memref<128x128xbf16, #tpu.memory_space<vmem>>, vector<128x128xbf16>,
    return
  }
  func.func @transform_0(%arg0: i32, %arg1: i32) -> (i32, i32) {
    %c0_i32 = arith.constant 0 : i32
    return %arg0, %arg1 : i32, i32
  }
  func.func @transform_1(%arg0: i32, %arg1: i32) -> (i32, i32) {
    %c0_i32 = arith.constant 0 : i32
    %c0_i32_0 = arith.constant 0 : i32
    return %c0_i32, %arg1 : i32, i32
  }
  func.func @transform_2(%arg0: i32, %arg1: i32) -> (i32, i32) {
    %c0_i32 = arith.constant 0 : i32
    %c0_i32_0 = arith.constant 0 : i32
    return %c0_i32, %arg1 : i32, i32
  }
  func.func @transform_3(%arg0: i32, %arg1: i32) -> (i32, i32) {
    %c0_i32 = arith.constant 0 : i32
    return %arg0, %arg1 : i32, i32
  }
}

</mosaic_0001>

<llo_original>
// kernel: conv_block.3
$region0: #{conv_block.3}
  #allocation0 [shape = 'u32[]', space=smem, size = 0x4, offset = 0x4, fixed_abs, tag = 'smem constant byte address 0x4 - core index']
  #allocation1 [shape = 'u32[144,128]{1,0:T(1,128)}', space=vmem, size = 0x12000, scoped, tag = 'internal scratch']
  %s0 = inlined_call_operand.hbm [shape: bf16[128,128], index: 0, kind: input, shape index: {}]
  %s1 = inlined_call_operand.hbm [shape: f32[1,128], index: 1, kind: input, shape index: {}]
  %s2 = inlined_call_operand.hbm [shape: f32[1,128], index: 2, kind: input, shape index: {}]
  %s3 = inlined_call_operand.hbm [shape: bf16[128,128], index: 3, kind: output, shape index: {}]
  %s4 = sld [smem:[#allocation0]]
  $region34: #{conv_block.3} parent=0
    _
  %s6 = ssub.s32 1, %s4
  %s7 = scalar_select 0, %s6, %s4
  $region1: #{conv_block.3} parent=0
    #allocation2 [shape = 'u8[32768]{0}', space=vmem, size = 0x8000, scoped, tag = 'input window, operand 0, single buffered']
    #allocation3 [shape = 's32[1]{0}', space=sflag, size = 0x4, scoped, tag = 'scoped memory for conv_block.3']
    #allocation4 [shape = 's32[1]{0}', space=sflag, size = 0x4, scoped, tag = 'scoped memory for conv_block.3']
    #allocation5 [shape = 'u8[512]{0}', space=vmem, size = 0x400, scoped, tag = 'input window, operand 1, single buffered']
    #allocation6 [shape = 's32[1]{0}', space=sflag, size = 0x4, scoped, tag = 'scoped memory for conv_block.3']
    #allocation7 [shape = 'u8[512]{0}', space=vmem, size = 0x400, scoped, tag = 'input window, operand 2, single buffered']
    #allocation8 [shape = 'u8[32768]{0}', space=vmem, size = 0x8000, scoped, tag = 'output window, operand 0, single buffered']
    %8 = vsyncpa [#allocation3], 0
    %9 = vsyncpa [#allocation6], 0
    %10 = vsyncpa [#allocation4], 0
    // Predicated region
    $region2: #{conv_block.3} parent=1 // pred_check
      _
    $region3: #{conv_block.3} parent=1 // pred_check_branch
      %12 = sbr.rel (0) target = $region5
    $region4: #{conv_block.3} parent=1 // pred_region
      %s14 = ssub.s32 1024, 1024
      %15 = vsyncadd [#allocation3], %s14
      %s16 = sshll.u32 [#allocation2], 4
      %s17 = int_to_ptr.vmem [resolvable:$true] %s16
      %22 = dma.hbm_to_vmem [thread:$0]  %s0, 1024, %s17, [#allocation3], 64, 64, 4
    $region5: #{conv_block.3} parent=1 // pred_fallthru
      _
    // Predicated region
    $region6: #{conv_block.3} parent=1 // pred_check
      _
    $region7: #{conv_block.3} parent=1 // pred_check_branch
      %24 = sbr.rel (0) target = $region9
    $region8: #{conv_block.3} parent=1 // pred_region
      %s26 = ssub.s32 16, 16
      %27 = vsyncadd [#allocation6], %s26
      %s29 = sshll.u32 [#allocation5], 4
      %s30 = int_to_ptr.vmem [resolvable:$true] %s29
      %32 = dma.hbm_to_vmem [thread:$0]  %s1, 16, %s30, [#allocation6]
    $region9: #{conv_block.3} parent=1 // pred_fallthru
      _
    // Predicated region
    $region10: #{conv_block.3} parent=1 // pred_check
      _
    $region11: #{conv_block.3} parent=1 // pred_check_branch
      %34 = sbr.rel (0) target = $region13
    $region12: #{conv_block.3} parent=1 // pred_region
      %s36 = ssub.s32 16, 16
      %37 = vsyncadd [#allocation6], %s36
      %s39 = sshll.u32 [#allocation7], 4
      %s40 = int_to_ptr.vmem [resolvable:$true] %s39
      %42 = dma.hbm_to_vmem [thread:$0]  %s2, 16, %s40, [#allocation6]
    $region13: #{conv_block.3} parent=1 // pred_fallthru
      _
    // Predicated region
    $region14: #{conv_block.3} parent=1 // pred_check
      _
    $region15: #{conv_block.3} parent=1 // pred_check_branch
      %44 = sbr.rel (0) target = $region17
    $region16: #{conv_block.3} parent=1 // pred_region
      %45 = dma.done [#allocation3], 1024
    $region17: #{conv_block.3} parent=1 // pred_fallthru
      _
    // Predicated region
    $region18: #{conv_block.3} parent=1 // pred_check
      _
    $region19: #{conv_block.3} parent=1 // pred_check_branch
      %47 = sbr.rel (0) target = $region21
    $region20: #{conv_block.3} parent=1 // pred_region
      %48 = dma.done [#allocation6], 16
    $region21: #{conv_block.3} parent=1 // pred_fallthru
      _
    // Predicated region
    $region22: #{conv_block.3} parent=1 // pred_check
      _
    $region23: #{conv_block.3} parent=1 // pred_check_branch
      %50 = sbr.rel (0) target = $region25
    $region24: #{conv_block.3} parent=1 // pred_region
      %51 = dma.done [#allocation6], 16
    $region25: #{conv_block.3} parent=1 // pred_fallthru
      _
    %v52 = vld [vmem:[#allocation2] sm:$0xf]
    %v53 = vld [vmem:[#allocation2 + $0x4] sm:$0xf]
    %v54 = vld [vmem:[#allocation2 + $0x8] sm:$0xf]
    %v55 = vld [vmem:[#allocation2 + $0xc] sm:$0xf]
    %v56 = vld [vmem:[#allocation2 + $0x10] sm:$0xf]
    %v57 = vld [vmem:[#allocation2 + $0x14] sm:$0xf]
    %v58 = vld [vmem:[#allocation2 + $0x18] sm:$0xf]
    %v59 = vld [vmem:[#allocation2 + $0x1c] sm:$0xf]
    %v60 = vld [vmem:[#allocation2 + $0x20] sm:$0xf]
    %v61 = vld [vmem:[#allocation2 + $0x24] sm:$0xf]
    %v62 = vld [vmem:[#allocation2 + $0x28] sm:$0xf]
    %v63 = vld [vmem:[#allocation2 + $0x2c] sm:$0xf]
    %v64 = vld [vmem:[#allocation2 + $0x30] sm:$0xf]
    %v65 = vld [vmem:[#allocation2 + $0x34] sm:$0xf]
    %v66 = vld [vmem:[#allocation2 + $0x38] sm:$0xf]
    %v67 = vld [vmem:[#allocation2 + $0x3c] sm:$0xf]
    %v68 = vunpack.c.l.bf16 %v52
    %v69 = vunpack.c.l.bf16 %v53
    %v70 = vunpack.c.l.bf16 %v54
    %v71 = vunpack.c.l.bf16 %v55
    %v72 = vunpack.c.l.bf16 %v56
    %v73 = vunpack.c.l.bf16 %v57
    %v74 = vunpack.c.l.bf16 %v58
    %v75 = vunpack.c.l.bf16 %v59
    %v76 = vunpack.c.l.bf16 %v60
    %v77 = vunpack.c.l.bf16 %v61
    %v78 = vunpack.c.l.bf16 %v62
    %v79 = vunpack.c.l.bf16 %v63
    %v80 = vunpack.c.l.bf16 %v64
    %v81 = vunpack.c.l.bf16 %v65
    %v82 = vunpack.c.l.bf16 %v66
    %v83 = vunpack.c.l.bf16 %v67
    %v84 = vld [vmem:[#allocation5] sm:$0x1]
    %v86 = vlaneseq
    %v87 = vshrl.u32 %v86, 7
    %v88 = vsub.s32 0, %v87
    %v89 = vrot.slane %v84, %v88
    %v91 = vmul.f32 %v68, %v89
    %v92 = vmul.f32 %v69, %v89
    %v93 = vmul.f32 %v70, %v89
    %v94 = vmul.f32 %v71, %v89
    %v95 = vmul.f32 %v72, %v89
    %v96 = vmul.f32 %v73, %v89
    %v97 = vmul.f32 %v74, %v89
    %v98 = vmul.f32 %v75, %v89
    %v99 = vmul.f32 %v76, %v89
    %v100 = vmul.f32 %v77, %v89
    %v101 = vmul.f32 %v78, %v89
    %v102 = vmul.f32 %v79, %v89
    %v103 = vmul.f32 %v80, %v89
    %v104 = vmul.f32 %v81, %v89
    %v105 = vmul.f32 %v82, %v89
    %v106 = vmul.f32 %v83, %v89
    %v107 = vld [vmem:[#allocation7] sm:$0x1]
    %v109 = vlaneseq
    %v110 = vshrl.u32 %v109, 7
    %v111 = vsub.s32 0, %v110
    %v112 = vrot.slane %v107, %v111
    %v114 = vadd.f32 %v91, %v112
    %v115 = vadd.f32 %v92, %v112
    %v116 = vadd.f32 %v93, %v112
    %v117 = vadd.f32 %v94, %v112
    %v118 = vadd.f32 %v95, %v112
    %v119 = vadd.f32 %v96, %v112
    %v120 = vadd.f32 %v97, %v112
    %v121 = vadd.f32 %v98, %v112
    %v122 = vadd.f32 %v99, %v112
    %v123 = vadd.f32 %v100, %v112
    %v124 = vadd.f32 %v101, %v112
    %v125 = vadd.f32 %v102, %v112
    %v126 = vadd.f32 %v103, %v112
    %v127 = vadd.f32 %v104, %v112
    %v128 = vadd.f32 %v105, %v112
    %v129 = vadd.f32 %v106, %v112
    %v130 = vmax.f32 %v114, 0.0
    %v131 = vmax.f32 %v115, 0.0
    %v132 = vmax.f32 %v116, 0.0
    %v133 = vmax.f32 %v117, 0.0
    %v134 = vmax.f32 %v118, 0.0
    %v135 = vmax.f32 %v119, 0.0
    %v136 = vmax.f32 %v120, 0.0
    %v137 = vmax.f32 %v121, 0.0
    %v138 = vmax.f32 %v122, 0.0
    %v139 = vmax.f32 %v123, 0.0
    %v140 = vmax.f32 %v124, 0.0
    %v141 = vmax.f32 %v125, 0.0
    %v142 = vmax.f32 %v126, 0.0
    %v143 = vmax.f32 %v127, 0.0
    %v144 = vmax.f32 %v128, 0.0
    %v145 = vmax.f32 %v129, 0.0
    %v146 = vmin.f32 %v130, 6.0
    %v147 = vmin.f32 %v131, 6.0
    %v148 = vmin.f32 %v132, 6.0
    %v149 = vmin.f32 %v133, 6.0
    %v150 = vmin.f32 %v134, 6.0
    %v151 = vmin.f32 %v135, 6.0
    %v152 = vmin.f32 %v136, 6.0
    %v153 = vmin.f32 %v137, 6.0
    %v154 = vmin.f32 %v138, 6.0
    %v155 = vmin.f32 %v139, 6.0
    %v156 = vmin.f32 %v140, 6.0
    %v157 = vmin.f32 %v141, 6.0
    %v158 = vmin.f32 %v142, 6.0
    %v159 = vmin.f32 %v143, 6.0
    %v160 = vmin.f32 %v144, 6.0
    %v161 = vmin.f32 %v145, 6.0
    %v162 = vpack.c.bf16 %v147, %v146
    %v163 = vpack.c.bf16 %v149, %v148
    %v164 = vpack.c.bf16 %v151, %v150
    %v165 = vpack.c.bf16 %v153, %v152
    %v166 = vpack.c.bf16 %v155, %v154
    %v167 = vpack.c.bf16 %v157, %v156
    %v168 = vpack.c.bf16 %v159, %v158
    %v169 = vpack.c.bf16 %v161, %v160
    %v178 = vunpack.c.l.b16 %v162
    %v179 = vunpack.c.h.b16 %v162
    %v180 = vunpack.c.l.b16 %v163
    %v181 = vunpack.c.h.b16 %v163
    %v182 = vunpack.c.l.b16 %v164
    %v183 = vunpack.c.h.b16 %v164
    %v184 = vunpack.c.l.b16 %v165
    %v185 = vunpack.c.h.b16 %v165
    %v186 = vunpack.c.l.b16 %v166
    %v187 = vunpack.c.h.b16 %v166
    %v188 = vunpack.c.l.b16 %v167
    %v189 = vunpack.c.h.b16 %v167
    %v190 = vunpack.c.l.b16 %v168
    %v191 = vunpack.c.h.b16 %v168
    %v192 = vunpack.c.l.b16 %v169
    %v193 = vunpack.c.h.b16 %v169
    %v194 = vpack.c.b16 %v178, %v178
    %v195 = vpack.c.b16 %v179, %v179
    %v196 = vpack.c.b16 %v180, %v180
    %v197 = vpack.c.b16 %v181, %v181
    %v198 = vpack.c.b16 %v182, %v182
    %v199 = vpack.c.b16 %v183, %v183
    %v200 = vpack.c.b16 %v184, %v184
    %v201 = vpack.c.b16 %v185, %v185
    %v202 = vpack.c.b16 %v186, %v186
    %v203 = vpack.c.b16 %v187, %v187
    %v204 = vpack.c.b16 %v188, %v188
    %v205 = vpack.c.b16 %v189, %v189
    %v206 = vpack.c.b16 %v190, %v190
    %v207 = vpack.c.b16 %v191, %v191
    %v208 = vpack.c.b16 %v192, %v192
    %v209 = vpack.c.b16 %v193, %v193
    %226 = vst [vmem:[#allocation8] sm:$0xf] %v194
    %227 = vst [vmem:[#allocation8 + $0x4] sm:$0xf] %v195
    %228 = vst [vmem:[#allocation8 + $0x8] sm:$0xf] %v196
    %229 = vst [vmem:[#allocation8 + $0xc] sm:$0xf] %v197
    %230 = vst [vmem:[#allocation8 + $0x10] sm:$0xf] %v198
    %231 = vst [vmem:[#allocation8 + $0x14] sm:$0xf] %v199
    %232 = vst [vmem:[#allocation8 + $0x18] sm:$0xf] %v200
    %233 = vst [vmem:[#allocation8 + $0x1c] sm:$0xf] %v201
    %234 = vst [vmem:[#allocation8 + $0x20] sm:$0xf] %v202
    %235 = vst [vmem:[#allocation8 + $0x24] sm:$0xf] %v203
    %236 = vst [vmem:[#allocation8 + $0x28] sm:$0xf] %v204
    %237 = vst [vmem:[#allocation8 + $0x2c] sm:$0xf] %v205
    %238 = vst [vmem:[#allocation8 + $0x30] sm:$0xf] %v206
    %239 = vst [vmem:[#allocation8 + $0x34] sm:$0xf] %v207
    %240 = vst [vmem:[#allocation8 + $0x38] sm:$0xf] %v208
    %241 = vst [vmem:[#allocation8 + $0x3c] sm:$0xf] %v209
    // Predicated region
    $region26: #{conv_block.3} parent=1 // pred_check
      _
    $region27: #{conv_block.3} parent=1 // pred_check_branch
      %243 = sbr.rel (0) target = $region29
    $region28: #{conv_block.3} parent=1 // pred_region
      %s245 = ssub.s32 1024, 1024
      %246 = vsyncadd [#allocation4], %s245
      %s247 = sshll.u32 [#allocation8], 4
      %s248 = int_to_ptr.vmem [resolvable:$true] %s247
      %253 = dma.vmem_to_hbm [thread:$0]  %s248, 1024, %s3, [#allocation4], 64, 64, 4
    $region29: #{conv_block.3} parent=1 // pred_fallthru
      _
    // Predicated region
    $region30: #{conv_block.3} parent=1 // pred_check
      _
    $region31: #{conv_block.3} parent=1 // pred_check_branch
      %255 = sbr.rel (0) target = $region33
    $region32: #{conv_block.3} parent=1 // pred_region
      %256 = dma.done [#allocation4], 1024
    $region33: #{conv_block.3} parent=1 // pred_fallthru
      _
    %257 = vsyncpa [#allocation3], 1
    %258 = vsyncpa [#allocation6], 1
    %259 = vsyncpa [#allocation4], 1

// kernel: conv_block.2
$region0: #{conv_block.2}
  #allocation0 [shape = 'u32[]', space=smem, size = 0x4, offset = 0x4, fixed_abs, tag = 'smem constant byte address 0x4 - core index']
  #allocation1 [shape = 'u32[144,128]{1,0:T(1,128)}', space=vmem, size = 0x12000, scoped, tag = 'internal scratch']
  #allocation2 [shape = 'f32[128,128]{1,0:T(8,128)}', space=vmem, size = 0x10000, scoped, tag = 'scratch operand']
  %s0 = inlined_call_operand.hbm [shape: bf16[128,128], index: 0, kind: input, shape index: {}]
  %s1 = inlined_call_operand.hbm [shape: bf16[128,128], index: 1, kind: input, shape index: {}]
  %s2 = inlined_call_operand.hbm [shape: bf16[128,128], index: 2, kind: output, shape index: {0}]
  %s3 = inlined_call_operand.hbm [shape: f32[1,128], index: 3, kind: output, shape index: {1}]
  %s4 = inlined_call_operand.hbm [shape: f32[1,128], index: 4, kind: output, shape index: {2}]
  %5 = xla_tuple %s2, %s3, %s4
  %s6 = sld [smem:[#allocation0]]
  $region50: #{conv_block.2} parent=0
    _
  %s8 = ssub.s32 1, %s6
  %s9 = scalar_select 0, %s8, %s6
  $region1: #{conv_block.2} parent=0
    #allocation3 [shape = 'u8[32768]{0}', space=vmem, size = 0x8000, scoped, tag = 'input window, operand 0, single buffered']
    #allocation4 [shape = 's32[1]{0}', space=sflag, size = 0x4, scoped, tag = 'scoped memory for conv_block.2']
    #allocation5 [shape = 's32[1]{0}', space=sflag, size = 0x4, scoped, tag = 'scoped memory for conv_block.2']
    #allocation6 [shape = 'u8[32768]{0}', space=vmem, size = 0x8000, scoped, tag = 'input window, operand 1, single buffered']
    #allocation7 [shape = 's32[1]{0}', space=sflag, size = 0x4, scoped, tag = 'scoped memory for conv_block.2']
    #allocation8 [shape = 'u8[32768]{0}', space=vmem, size = 0x8000, scoped, tag = 'output window, operand 0, single buffered']
    #allocation9 [shape = 'u8[512]{0}', space=vmem, size = 0x400, scoped, tag = 'output window, operand 1, single buffered']
    #allocation10 [shape = 's32[1]{0}', space=sflag, size = 0x4, scoped, tag = 'scoped memory for conv_block.2']
    #allocation11 [shape = 'u8[512]{0}', space=vmem, size = 0x400, scoped, tag = 'output window, operand 2, single buffered']
    %10 = vsyncpa [#allocation4], 0
    %11 = vsyncpa [#allocation7], 0
    %12 = vsyncpa [#allocation5], 0
    %13 = vsyncpa [#allocation10], 0
    // Predicated region
    $region2: #{conv_block.2} parent=1 // pred_check
      _
    $region3: #{conv_block.2} parent=1 // pred_check_branch
      %15 = sbr.rel (0) target = $region5
    $region4: #{conv_block.2} parent=1 // pred_region
      %s17 = ssub.s32 1024, 1024
      %18 = vsyncadd [#allocation4], %s17
      %s19 = sshll.u32 [#allocation3], 4
      %s20 = int_to_ptr.vmem [resolvable:$true] %s19
      %25 = dma.hbm_to_vmem [thread:$0]  %s0, 1024, %s20, [#allocation4], 64, 64, 4
    $region5: #{conv_block.2} parent=1 // pred_fallthru
      _
    // Predicated region
    $region6: #{conv_block.2} parent=1 // pred_check
      _
    $region7: #{conv_block.2} parent=1 // pred_check_branch
      %27 = sbr.rel (0) target = $region9
    $region8: #{conv_block.2} parent=1 // pred_region
      %s29 = ssub.s32 1024, 1024
      %30 = vsyncadd [#allocation7], %s29
      %s31 = sshll.u32 [#allocation6], 4
      %s32 = int_to_ptr.vmem [resolvable:$true] %s31
      %37 = dma.hbm_to_vmem [thread:$0]  %s1, 1024, %s32, [#allocation7], 64, 64, 4
    $region9: #{conv_block.2} parent=1 // pred_fallthru
      _
    // Predicated region
    $region10: #{conv_block.2} parent=1 // pred_check
      _
    $region11: #{conv_block.2} parent=1 // pred_check_branch
      %39 = sbr.rel (0) target = $region13
    $region12: #{conv_block.2} parent=1 // pred_region
      %40 = dma.done [#allocation4], 1024
    $region13: #{conv_block.2} parent=1 // pred_fallthru
      _
    // Predicated region
    $region14: #{conv_block.2} parent=1 // pred_check
      _
    $region15: #{conv_block.2} parent=1 // pred_check_branch
      %42 = sbr.rel (0) target = $region17
    $region16: #{conv_block.2} parent=1 // pred_region
      %43 = dma.done [#allocation7], 1024
    $region17: #{conv_block.2} parent=1 // pred_fallthru
      _
    %p45 = scmp.eq.s32.totalorder 0, 0
    // Predicated region
    $region18: #{conv_block.2} parent=1 // pred_check
      %p46 = pneg %p45
    $region19: #{conv_block.2} parent=1 // pred_check_branch
      %48 = sbr.rel (%p46) target = $region21
    $region20: #{conv_block.2} parent=1 // pred_region
      %49 = vst [vmem:[#allocation2] sm:$0xff] 0.0
      %50 = vst [vmem:[#allocation2 + $0x8] sm:$0xff] 0.0
      %51 = vst [vmem:[#allocation2 + $0x10] sm:$0xff] 0.0
      %52 = vst [vmem:[#allocation2 + $0x18] sm:$0xff] 0.0
      %53 = vst [vmem:[#allocation2 + $0x20] sm:$0xff] 0.0
      %54 = vst [vmem:[#allocation2 + $0x28] sm:$0xff] 0.0
      %55 = vst [vmem:[#allocation2 + $0x30] sm:$0xff] 0.0
      %56 = vst [vmem:[#allocation2 + $0x38] sm:$0xff] 0.0
      %57 = vst [vmem:[#allocation2 + $0x40] sm:$0xff] 0.0
      %58 = vst [vmem:[#allocation2 + $0x48] sm:$0xff] 0.0
      %59 = vst [vmem:[#allocation2 + $0x50] sm:$0xff] 0.0
      %60 = vst [vmem:[#allocation2 + $0x58] sm:$0xff] 0.0
      %61 = vst [vmem:[#allocation2 + $0x60] sm:$0xff] 0.0
      %62 = vst [vmem:[#allocation2 + $0x68] sm:$0xff] 0.0
      %63 = vst [vmem:[#allocation2 + $0x70] sm:$0xff] 0.0
      %64 = vst [vmem:[#allocation2 + $0x78] sm:$0xff] 0.0
    $region21: #{conv_block.2} parent=1 // pred_fallthru
      _
    %v65 = vld [vmem:[#allocation2] sm:$0xff]
    %v66 = vld [vmem:[#allocation2 + $0x8] sm:$0xff]
    %v67 = vld [vmem:[#allocation2 + $0x10] sm:$0xff]
    %v68 = vld [vmem:[#allocation2 + $0x18] sm:$0xff]
    %v69 = vld [vmem:[#allocation2 + $0x20] sm:$0xff]
    %v70 = vld [vmem:[#allocation2 + $0x28] sm:$0xff]
    %v71 = vld [vmem:[#allocation2 + $0x30] sm:$0xff]
    %v72 = vld [vmem:[#allocation2 + $0x38] sm:$0xff]
    %v73 = vld [vmem:[#allocation2 + $0x40] sm:$0xff]
    %v74 = vld [vmem:[#allocation2 + $0x48] sm:$0xff]
    %v75 = vld [vmem:[#allocation2 + $0x50] sm:$0xff]
    %v76 = vld [vmem:[#allocation2 + $0x58] sm:$0xff]
    %v77 = vld [vmem:[#allocation2 + $0x60] sm:$0xff]
    %v78 = vld [vmem:[#allocation2 + $0x68] sm:$0xff]
    %v79 = vld [vmem:[#allocation2 + $0x70] sm:$0xff]
    %v80 = vld [vmem:[#allocation2 + $0x78] sm:$0xff]
    %v81 = vld [vmem:[#allocation3] sm:$0xf]
    %v82 = vld [vmem:[#allocation3 + $0x4] sm:$0xf]
    %v83 = vld [vmem:[#allocation3 + $0x8] sm:$0xf]
    %v84 = vld [vmem:[#allocation3 + $0xc] sm:$0xf]
    %v85 = vld [vmem:[#allocation3 + $0x10] sm:$0xf]
    %v86 = vld [vmem:[#allocation3 + $0x14] sm:$0xf]
    %v87 = vld [vmem:[#allocation3 + $0x18] sm:$0xf]
    %v88 = vld [vmem:[#allocation3 + $0x1c] sm:$0xf]
    %v89 = vld [vmem:[#allocation3 + $0x20] sm:$0xf]
    %v90 = vld [vmem:[#allocation3 + $0x24] sm:$0xf]
    %v91 = vld [vmem:[#allocation3 + $0x28] sm:$0xf]
    %v92 = vld [vmem:[#allocation3 + $0x2c] sm:$0xf]
    %v93 = vld [vmem:[#allocation3 + $0x30] sm:$0xf]
    %v94 = vld [vmem:[#allocation3 + $0x34] sm:$0xf]
    %v95 = vld [vmem:[#allocation3 + $0x38] sm:$0xf]
    %v96 = vld [vmem:[#allocation3 + $0x3c] sm:$0xf]
    %v97 = vld [vmem:[#allocation6] sm:$0xf]
    %v98 = vld [vmem:[#allocation6 + $0x4] sm:$0xf]
    %v99 = vld [vmem:[#allocation6 + $0x8] sm:$0xf]
    %v100 = vld [vmem:[#allocation6 + $0xc] sm:$0xf]
    %v101 = vld [vmem:[#allocation6 + $0x10] sm:$0xf]
    %v102 = vld [vmem:[#allocation6 + $0x14] sm:$0xf]
    %v103 = vld [vmem:[#allocation6 + $0x18] sm:$0xf]
    %v104 = vld [vmem:[#allocation6 + $0x1c] sm:$0xf]
    %v105 = vld [vmem:[#allocation6 + $0x20] sm:$0xf]
    %v106 = vld [vmem:[#allocation6 + $0x24] sm:$0xf]
    %v107 = vld [vmem:[#allocation6 + $0x28] sm:$0xf]
    %v108 = vld [vmem:[#allocation6 + $0x2c] sm:$0xf]
    %v109 = vld [vmem:[#allocation6 + $0x30] sm:$0xf]
    %v110 = vld [vmem:[#allocation6 + $0x34] sm:$0xf]
    %v111 = vld [vmem:[#allocation6 + $0x38] sm:$0xf]
    %v112 = vld [vmem:[#allocation6 + $0x3c] sm:$0xf]
    %v129 = vunpack.c.l.b16 %v81
    %v130 = vunpack.c.l.b16 %v82
    %v131 = vunpack.c.l.b16 %v83
    %v132 = vunpack.c.l.b16 %v84
    %v133 = vunpack.c.l.b16 %v85
    %v134 = vunpack.c.l.b16 %v86
    %v135 = vunpack.c.l.b16 %v87
    %v136 = vunpack.c.l.b16 %v88
    %v137 = vunpack.c.l.b16 %v89
    %v138 = vunpack.c.l.b16 %v90
    %v139 = vunpack.c.l.b16 %v91
    %v140 = vunpack.c.l.b16 %v92
    %v141 = vunpack.c.l.b16 %v93
    %v142 = vunpack.c.l.b16 %v94
    %v143 = vunpack.c.l.b16 %v95
    %v144 = vunpack.c.l.b16 %v96
    %v145 = vpack.c.b16 %v130, %v129
    %v146 = vpack.c.b16 %v132, %v131
    %v147 = vpack.c.b16 %v134, %v133
    %v148 = vpack.c.b16 %v136, %v135
    %v149 = vpack.c.b16 %v138, %v137
    %v150 = vpack.c.b16 %v140, %v139
    %v151 = vpack.c.b16 %v142, %v141
    %v152 = vpack.c.b16 %v144, %v143
    %v177 = vunpack.c.l.b16 %v97
    %v178 = vunpack.c.l.b16 %v98
    %v179 = vunpack.c.l.b16 %v99
    %v180 = vunpack.c.l.b16 %v100
    %v181 = vunpack.c.l.b16 %v101
    %v182 = vunpack.c.l.b16 %v102
    %v183 = vunpack.c.l.b16 %v103
    %v184 = vunpack.c.l.b16 %v104
    %v185 = vunpack.c.l.b16 %v105
    %v186 = vunpack.c.l.b16 %v106
    %v187 = vunpack.c.l.b16 %v107
    %v188 = vunpack.c.l.b16 %v108
    %v189 = vunpack.c.l.b16 %v109
    %v190 = vunpack.c.l.b16 %v110
    %v191 = vunpack.c.l.b16 %v111
    %v192 = vunpack.c.l.b16 %v112
    %v193 = vpack.c.b16 %v178, %v177
    %v194 = vpack.c.b16 %v180, %v179
    %v195 = vpack.c.b16 %v182, %v181
    %v196 = vpack.c.b16 %v184, %v183
    %v197 = vpack.c.b16 %v186, %v185
    %v198 = vpack.c.b16 %v188, %v187
    %v199 = vpack.c.b16 %v190, %v189
    %v200 = vpack.c.b16 %v192, %v191
    %209 = vmatprep.subr.bf16.mxu0 0
    %210 = vmatpush1.bf16.msra.mxu0 %v193
    %211 = vmatprep.subr.bf16.mxu0 0
    %212 = vmatpush1.bf16.msra.mxu0 %v194
    %213 = vmatprep.subr.bf16.mxu0 0
    %214 = vmatpush1.bf16.msra.mxu0 %v195
    %215 = vmatprep.subr.bf16.mxu0 0
    %216 = vmatpush1.bf16.msra.mxu0 %v196
    %217 = vmatprep.subr.bf16.mxu0 0
    %218 = vmatpush1.bf16.msra.mxu0 %v197
    %219 = vmatprep.subr.bf16.mxu0 0
    %220 = vmatpush1.bf16.msra.mxu0 %v198
    %221 = vmatprep.subr.bf16.mxu0 0
    %222 = vmatpush1.bf16.msra.mxu0 %v199
    %223 = vmatprep.subr.bf16.mxu0 0
    %224 = vmatpush1.bf16.msra.mxu0 %v200
    %225 = vmatprep.subr.bf16.mxu0 0
    %226 = vmatpush1.bf16.msra.mxu0 0
    %227 = vmatprep.subr.bf16.mxu0 0
    %228 = vmatpush1.bf16.msra.mxu0 0
    %229 = vmatprep.subr.bf16.mxu0 0
    %230 = vmatpush1.bf16.msra.mxu0 0
    %231 = vmatprep.subr.bf16.mxu0 0
    %232 = vmatpush1.bf16.msra.mxu0 0
    %233 = vmatprep.subr.bf16.mxu0 0
    %234 = vmatpush1.bf16.msra.mxu0 0
    %235 = vmatprep.subr.bf16.mxu0 0
    %236 = vmatpush1.bf16.msra.mxu0 0
    %237 = vmatprep.subr.bf16.mxu0 0
    %238 = vmatpush1.bf16.msra.mxu0 0
    %239 = vmatprep.subr.bf16.mxu0 0
    %240 = vmatpush1.bf16.msra.mxu0 0
    %241 = vmatprep.mubr.bf16.mxu0 0
    %242 = vmatmul.mubr.bf16.gmra.mrb[0].mxu0 %v145
    %v243 = vpop.f32.mrb[0].mxu0
    %v244 = vadd.f32 0.0, %v243
    %v245 = vpop.f32.mrb[0].mxu0
    %v246 = vpop.f32.mrb[0].mxu0
    %v247 = vadd.f32 0.0, %v246
    %v248 = vpop.f32.mrb[0].mxu0
    %249 = vmatprep.mubr.bf16.mxu0 0
    %250 = vmatmul.mubr.bf16.gmra.mrb[0].mxu0 %v146
    %v251 = vpop.f32.mrb[0].mxu0
    %v252 = vadd.f32 0.0, %v251
    %v253 = vpop.f32.mrb[0].mxu0
    %v254 = vpop.f32.mrb[0].mxu0
    %v255 = vadd.f32 0.0, %v254
    %v256 = vpop.f32.mrb[0].mxu0
    %257 = vmatprep.mubr.bf16.mxu0 0
    %258 = vmatmul.mubr.bf16.gmra.mrb[0].mxu0 %v147
    %v259 = vpop.f32.mrb[0].mxu0
    %v260 = vadd.f32 0.0, %v259
    %v261 = vpop.f32.mrb[0].mxu0
    %v262 = vpop.f32.mrb[0].mxu0
    %v263 = vadd.f32 0.0, %v262
    %v264 = vpop.f32.mrb[0].mxu0
    %265 = vmatprep.mubr.bf16.mxu0 0
    %266 = vmatmul.mubr.bf16.gmra.mrb[0].mxu0 %v148
    %v267 = vpop.f32.mrb[0].mxu0
    %v268 = vadd.f32 0.0, %v267
    %v269 = vpop.f32.mrb[0].mxu0
    %v270 = vpop.f32.mrb[0].mxu0
    %v271 = vadd.f32 0.0, %v270
    %v272 = vpop.f32.mrb[0].mxu0
    %273 = vmatprep.mubr.bf16.mxu0 0
    %274 = vmatmul.mubr.bf16.gmra.mrb[0].mxu0 %v149
    %v275 = vpop.f32.mrb[0].mxu0
    %v276 = vadd.f32 0.0, %v275
    %v277 = vpop.f32.mrb[0].mxu0
    %v278 = vpop.f32.mrb[0].mxu0
    %v279 = vadd.f32 0.0, %v278
    %v280 = vpop.f32.mrb[0].mxu0
    %281 = vmatprep.mubr.bf16.mxu0 0
    %282 = vmatmul.mubr.bf16.gmra.mrb[0].mxu0 %v150
    %v283 = vpop.f32.mrb[0].mxu0
    %v284 = vadd.f32 0.0, %v283
    %v285 = vpop.f32.mrb[0].mxu0
    %v286 = vpop.f32.mrb[0].mxu0
    %v287 = vadd.f32 0.0, %v286
    %v288 = vpop.f32.mrb[0].mxu0
    %289 = vmatprep.mubr.bf16.mxu0 0
    %290 = vmatmul.mubr.bf16.gmra.mrb[0].mxu0 %v151
    %v291 = vpop.f32.mrb[0].mxu0
    %v292 = vadd.f32 0.0, %v291
    %v293 = vpop.f32.mrb[0].mxu0
    %v294 = vpop.f32.mrb[0].mxu0
    %v295 = vadd.f32 0.0, %v294
    %v296 = vpop.f32.mrb[0].mxu0
    %297 = vmatprep.mubr.bf16.mxu0 0
    %298 = vmatmul.mubr.bf16.gmra.mrb[0].mxu0 %v152
    %v299 = vpop.f32.mrb[0].mxu0
    %v300 = vadd.f32 0.0, %v299
    %v301 = vpop.f32.mrb[0].mxu0
    %v302 = vpop.f32.mrb[0].mxu0
    %v303 = vadd.f32 0.0, %v302
    %v304 = vpop.f32.mrb[0].mxu0
    %305 = vdwg.mxu0
    %v306 = vadd.f32 %v65, %v244
    %v307 = vadd.f32 %v66, %v247
    %v308 = vadd.f32 %v67, %v252
    %v309 = vadd.f32 %v68, %v255
    %v310 = vadd.f32 %v69, %v260
    %v311 = vadd.f32 %v70, %v263
    %v312 = vadd.f32 %v71, %v268
    %v313 = vadd.f32 %v72, %v271
    %v314 = vadd.f32 %v73, %v276
    %v315 = vadd.f32 %v74, %v279
    %v316 = vadd.f32 %v75, %v284
    %v317 = vadd.f32 %v76, %v287
    %v318 = vadd.f32 %v77, %v292
    %v319 = vadd.f32 %v78, %v295
    %v320 = vadd.f32 %v79, %v300
    %v321 = vadd.f32 %v80, %v303
    %322 = vst [vmem:[#allocation2] sm:$0xff] %v306
    %323 = vst [vmem:[#allocation2 + $0x8] sm:$0xff] %v307
    %324 = vst [vmem:[#allocation2 + $0x10] sm:$0xff] %v308
    %325 = vst [vmem:[#allocation2 + $0x18] sm:$0xff] %v309
    %326 = vst [vmem:[#allocation2 + $0x20] sm:$0xff] %v310
    %327 = vst [vmem:[#allocation2 + $0x28] sm:$0xff] %v311
    %328 = vst [vmem:[#allocation2 + $0x30] sm:$0xff] %v312
    %329 = vst [vmem:[#allocation2 + $0x38] sm:$0xff] %v313
    %330 = vst [vmem:[#allocation2 + $0x40] sm:$0xff] %v314
    %331 = vst [vmem:[#allocation2 + $0x48] sm:$0xff] %v315
    %332 = vst [vmem:[#allocation2 + $0x50] sm:$0xff] %v316
    %333 = vst [vmem:[#allocation2 + $0x58] sm:$0xff] %v317
    %334 = vst [vmem:[#allocation2 + $0x60] sm:$0xff] %v318
    %335 = vst [vmem:[#allocation2 + $0x68] sm:$0xff] %v319
    %336 = vst [vmem:[#allocation2 + $0x70] sm:$0xff] %v320
    %337 = vst [vmem:[#allocation2 + $0x78] sm:$0xff] %v321
    // Predicated region
    $region22: #{conv_block.2} parent=1 // pred_check
      %p338 = pneg %p45
    $region23: #{conv_block.2} parent=1 // pred_check_branch
      %340 = sbr.rel (%p338) target = $region25
    $region24: #{conv_block.2} parent=1 // pred_region
      %v341 = vld [vmem:[#allocation2] sm:$0xff]
      %v342 = vld [vmem:[#allocation2 + $0x8] sm:$0xff]
      %v343 = vld [vmem:[#allocation2 + $0x10] sm:$0xff]
      %v344 = vld [vmem:[#allocation2 + $0x18] sm:$0xff]
      %v345 = vld [vmem:[#allocation2 + $0x20] sm:$0xff]
      %v346 = vld [vmem:[#allocation2 + $0x28] sm:$0xff]
      %v347 = vld [vmem:[#allocation2 + $0x30] sm:$0xff]
      %v348 = vld [vmem:[#allocation2 + $0x38] sm:$0xff]
      %v349 = vld [vmem:[#allocation2 + $0x40] sm:$0xff]
      %v350 = vld [vmem:[#allocation2 + $0x48] sm:$0xff]
      %v351 = vld [vmem:[#allocation2 + $0x50] sm:$0xff]
      %v352 = vld [vmem:[#allocation2 + $0x58] sm:$0xff]
      %v353 = vld [vmem:[#allocation2 + $0x60] sm:$0xff]
      %v354 = vld [vmem:[#allocation2 + $0x68] sm:$0xff]
      %v355 = vld [vmem:[#allocation2 + $0x70] sm:$0xff]
      %v356 = vld [vmem:[#allocation2 + $0x78] sm:$0xff]
      %v357 = vpack.c.bf16 %v342, %v341
      %v358 = vpack.c.bf16 %v344, %v343
      %v359 = vpack.c.bf16 %v346, %v345
      %v360 = vpack.c.bf16 %v348, %v347
      %v361 = vpack.c.bf16 %v350, %v349
      %v362 = vpack.c.bf16 %v352, %v351
      %v363 = vpack.c.bf16 %v354, %v353
      %v364 = vpack.c.bf16 %v356, %v355
      %v373 = vunpack.c.l.b16 %v357
      %v374 = vunpack.c.h.b16 %v357
      %v375 = vunpack.c.l.b16 %v358
      %v376 = vunpack.c.h.b16 %v358
      %v377 = vunpack.c.l.b16 %v359
      %v378 = vunpack.c.h.b16 %v359
      %v379 = vunpack.c.l.b16 %v360
      %v380 = vunpack.c.h.b16 %v360
      %v381 = vunpack.c.l.b16 %v361
      %v382 = vunpack.c.h.b16 %v361
      %v383 = vunpack.c.l.b16 %v362
      %v384 = vunpack.c.h.b16 %v362
      %v385 = vunpack.c.l.b16 %v363
      %v386 = vunpack.c.h.b16 %v363
      %v387 = vunpack.c.l.b16 %v364
      %v388 = vunpack.c.h.b16 %v364
      %v389 = vpack.c.b16 %v373, %v373
      %v390 = vpack.c.b16 %v374, %v374
      %v391 = vpack.c.b16 %v375, %v375
      %v392 = vpack.c.b16 %v376, %v376
      %v393 = vpack.c.b16 %v377, %v377
      %v394 = vpack.c.b16 %v378, %v378
      %v395 = vpack.c.b16 %v379, %v379
      %v396 = vpack.c.b16 %v380, %v380
      %v397 = vpack.c.b16 %v381, %v381
      %v398 = vpack.c.b16 %v382, %v382
      %v399 = vpack.c.b16 %v383, %v383
      %v400 = vpack.c.b16 %v384, %v384
      %v401 = vpack.c.b16 %v385, %v385
      %v402 = vpack.c.b16 %v386, %v386
      %v403 = vpack.c.b16 %v387, %v387
      %v404 = vpack.c.b16 %v388, %v388
      %421 = vst [vmem:[#allocation8] sm:$0xf] %v389
      %422 = vst [vmem:[#allocation8 + $0x4] sm:$0xf] %v390
      %423 = vst [vmem:[#allocation8 + $0x8] sm:$0xf] %v391
      %424 = vst [vmem:[#allocation8 + $0xc] sm:$0xf] %v392
      %425 = vst [vmem:[#allocation8 + $0x10] sm:$0xf] %v393
      %426 = vst [vmem:[#allocation8 + $0x14] sm:$0xf] %v394
      %427 = vst [vmem:[#allocation8 + $0x18] sm:$0xf] %v395
      %428 = vst [vmem:[#allocation8 + $0x1c] sm:$0xf] %v396
      %429 = vst [vmem:[#allocation8 + $0x20] sm:$0xf] %v397
      %430 = vst [vmem:[#allocation8 + $0x24] sm:$0xf] %v398
      %431 = vst [vmem:[#allocation8 + $0x28] sm:$0xf] %v399
      %432 = vst [vmem:[#allocation8 + $0x2c] sm:$0xf] %v400
      %433 = vst [vmem:[#allocation8 + $0x30] sm:$0xf] %v401
      %434 = vst [vmem:[#allocation8 + $0x34] sm:$0xf] %v402
      %435 = vst [vmem:[#allocation8 + $0x38] sm:$0xf] %v403
      %436 = vst [vmem:[#allocation8 + $0x3c] sm:$0xf] %v404
      %v437 = vadd.f32 %v341, %v342
      %v438 = vadd.f32 %v437, %v343
      %v439 = vadd.f32 %v438, %v344
      %v440 = vadd.f32 %v439, %v345
      %v441 = vadd.f32 %v440, %v346
      %v442 = vadd.f32 %v441, %v347
      %v443 = vadd.f32 %v442, %v348
      %v444 = vadd.f32 %v443, %v349
      %v445 = vadd.f32 %v444, %v350
      %v446 = vadd.f32 %v445, %v351
      %v447 = vadd.f32 %v446, %v352
      %v448 = vadd.f32 %v447, %v353
      %v449 = vadd.f32 %v448, %v354
      %v450 = vadd.f32 %v449, %v355
      %v451 = vadd.f32 %v450, %v356
      %v452 = vrot.slane %v451, 4
      %v453 = vadd.f32 %v451, %v452
      %v454 = vrot.slane %v453, 2
      %v455 = vadd.f32 %v453, %v454
      %v456 = vrot.slane %v455, 1
      %v457 = vadd.f32 %v455, %v456
      %458 = vst [vmem:[#allocation9] sm:$0x1] %v457
      %v459 = vmul.f32 %v341, %v341
      %v460 = vmul.f32 %v342, %v342
      %v461 = vmul.f32 %v343, %v343
      %v462 = vmul.f32 %v344, %v344
      %v463 = vmul.f32 %v345, %v345
      %v464 = vmul.f32 %v346, %v346
      %v465 = vmul.f32 %v347, %v347
      %v466 = vmul.f32 %v348, %v348
      %v467 = vmul.f32 %v349, %v349
      %v468 = vmul.f32 %v350, %v350
      %v469 = vmul.f32 %v351, %v351
      %v470 = vmul.f32 %v352, %v352
      %v471 = vmul.f32 %v353, %v353
      %v472 = vmul.f32 %v354, %v354
      %v473 = vmul.f32 %v355, %v355
      %v474 = vmul.f32 %v356, %v356
      %v475 = vadd.f32 %v459, %v460
      %v476 = vadd.f32 %v475, %v461
      %v477 = vadd.f32 %v476, %v462
      %v478 = vadd.f32 %v477, %v463
      %v479 = vadd.f32 %v478, %v464
      %v480 = vadd.f32 %v479, %v465
      %v481 = vadd.f32 %v480, %v466
      %v482 = vadd.f32 %v481, %v467
      %v483 = vadd.f32 %v482, %v468
      %v484 = vadd.f32 %v483, %v469
      %v485 = vadd.f32 %v484, %v470
      %v486 = vadd.f32 %v485, %v471
      %v487 = vadd.f32 %v486, %v472
      %v488 = vadd.f32 %v487, %v473
      %v489 = vadd.f32 %v488, %v474
      %v490 = vrot.slane %v489, 4
      %v491 = vadd.f32 %v489, %v490
      %v492 = vrot.slane %v491, 2
      %v493 = vadd.f32 %v491, %v492
      %v494 = vrot.slane %v493, 1
      %v495 = vadd.f32 %v493, %v494
      %496 = vst [vmem:[#allocation11] sm:$0x1] %v495
    $region25: #{conv_block.2} parent=1 // pred_fallthru
      _
    // Predicated region
    $region26: #{conv_block.2} parent=1 // pred_check
      _
    $region27: #{conv_block.2} parent=1 // pred_check_branch
      %498 = sbr.rel (0) target = $region29
    $region28: #{conv_block.2} parent=1 // pred_region
      %s500 = ssub.s32 1024, 1024
      %501 = vsyncadd [#allocation5], %s500
      %s502 = sshll.u32 [#allocation8], 4
      %s503 = int_to_ptr.vmem [resolvable:$true] %s502
      %508 = dma.vmem_to_hbm [thread:$0]  %s503, 1024, %s2, [#allocation5], 64, 64, 4
    $region29: #{conv_block.2} parent=1 // pred_fallthru
      _
    // Predicated region
    $region30: #{conv_block.2} parent=1 // pred_check
      _
    $region31: #{conv_block.2} parent=1 // pred_check_branch
      %510 = sbr.rel (0) target = $region33
    $region32: #{conv_block.2} parent=1 // pred_region
      %s512 = ssub.s32 16, 16
      %513 = vsyncadd [#allocation10], %s512
      %s515 = sshll.u32 [#allocation9], 4
      %s516 = int_to_ptr.vmem [resolvable:$true] %s515
      %518 = dma.vmem_to_hbm [thread:$0]  %s516, 16, %s3, [#allocation10]
    $region33: #{conv_block.2} parent=1 // pred_fallthru
      _
    // Predicated region
    $region34: #{conv_block.2} parent=1 // pred_check
      _
    $region35: #{conv_block.2} parent=1 // pred_check_branch
      %520 = sbr.rel (0) target = $region37
    $region36: #{conv_block.2} parent=1 // pred_region
      %s522 = ssub.s32 16, 16
      %523 = vsyncadd [#allocation10], %s522
      %s525 = sshll.u32 [#allocation11], 4
      %s526 = int_to_ptr.vmem [resolvable:$true] %s525
      %528 = dma.vmem_to_hbm [thread:$0]  %s526, 16, %s4, [#allocation10]
    $region37: #{conv_block.2} parent=1 // pred_fallthru
      _
    // Predicated region
    $region38: #{conv_block.2} parent=1 // pred_check
      _
    $region39: #{conv_block.2} parent=1 // pred_check_branch
      %530 = sbr.rel (0) target = $region41
    $region40: #{conv_block.2} parent=1 // pred_region
      %531 = dma.done [#allocation5], 1024
    $region41: #{conv_block.2} parent=1 // pred_fallthru
      _
    // Predicated region
    $region42: #{conv_block.2} parent=1 // pred_check
      _
    $region43: #{conv_block.2} parent=1 // pred_check_branch
      %533 = sbr.rel (0) target = $region45
    $region44: #{conv_block.2} parent=1 // pred_region
      %534 = dma.done [#allocation10], 16
    $region45: #{conv_block.2} parent=1 // pred_fallthru
      _
    // Predicated region
    $region46: #{conv_block.2} parent=1 // pred_check
      _
    $region47: #{conv_block.2} parent=1 // pred_check_branch
      %536 = sbr.rel (0) target = $region49
    $region48: #{conv_block.2} parent=1 // pred_region
      %537 = dma.done [#allocation10], 16
    $region49: #{conv_block.2} parent=1 // pred_fallthru
      _
    %538 = vsyncpa [#allocation4], 1
    %539 = vsyncpa [#allocation7], 1
    %540 = vsyncpa [#allocation5], 1
    %541 = vsyncpa [#allocation10], 1

</llo_original>
